<compile_context>
chip_gen: v7x
topology: tpu7x:2x2x1
jax: 0.10.0
libtpu: 0.0.40
codegen_flags: <defaults>
</compile_context>

<pallas_src>
import jax
import jax.numpy as jnp
from jax.experimental import pallas as pl
from jax.experimental.pallas import tpu as pltpu

_LANE = 128


def outconv_kernel(x_ref, w_ref, b_ref, o_ref):
    # x_ref: (C, TS)   lane-dense input tile (native dtype; bf16 stays bf16)
    # w_ref: (OC, C)   1x1x1 conv weights (constant block, resident in VMEM)
    # b_ref: (OC, 1)   bias
    # o_ref: (OC, TS)  lane-dense output tile
    y = jnp.dot(w_ref[...], x_ref[...], preferred_element_type=jnp.float32)
    o_ref[...] = (y + b_ref[...].astype(jnp.float32)).astype(o_ref.dtype)


def _round_up(a, m):
    return ((a + m - 1) // m) * m


def _choose_spatial_tile(S, C, OC, dtype_bytes, B):
    """Largest lane-dense TS fitting VMEM while keeping ~4 total grid steps."""
    # Conservative double-buffered budget: 2 buffers of (C+OC)*TS columns.
    # 12 MiB fits v5e's 16 MiB scoped-VMEM default and v7x's 32 MiB with
    # headroom; raise vmem_limit_bytes if this head is scaled to very large C.
    vmem_budget = 12 << 20
    per_col = 2 * (C + OC) * dtype_bytes
    ts_vmem = max(_LANE, (vmem_budget // per_col) // _LANE * _LANE)
    ts_cap = min(ts_vmem, 32768)

    if S % _LANE != 0 and S <= ts_cap:
        # Full-extent spatial block: legal for any S (block dim == array dim),
        # single tile per batch element, no padding anywhere.
        return S

    # Keep roughly 4 total grid steps (>= 2 per v7x TensorCore) while making
    # each tile as large as possible (>= 1024 lanes whenever S allows).
    target_tiles = max(1, -(-4 // max(B, 1)))          # ceil(4 / B)
    ts_target = _round_up(pl.cdiv(S, target_tiles), _LANE)
    ts_floor = min(1024, _round_up(S, _LANE))
    return min(ts_cap, max(ts_target, ts_floor))


def outconv(x_ncdhw, w, b):
    """outconv forward. x_ncdhw: (B, C, D, H, W) -> (B, OC, D, H, W)."""
    B, C, D, H, W = x_ncdhw.shape
    OC = w.shape[0]
    S = D * H * W
    dtype_bytes = jnp.dtype(x_ncdhw.dtype).itemsize

    # Contiguous trailing dims -> free reshapes (no HBM copy for NCDHW input).
    x2 = x_ncdhw.reshape(B, C, S)
    w2 = w.reshape(OC, C)
    b2 = b.reshape(OC, 1)

    ts = _choose_spatial_tile(S, C, OC, dtype_bytes, B)
    n_tiles = pl.cdiv(S, ts)

    cost = pl.CostEstimate(
        flops=2 * B * OC * C * S,
        transcendentals=0,
        bytes_accessed=(B * C * S + B * OC * S) * dtype_bytes
        + (OC * C + OC) * jnp.dtype(w.dtype).itemsize,
    )

    out = pl.pallas_call(
        outconv_kernel,
        out_shape=jax.ShapeDtypeStruct((B, OC, S), x_ncdhw.dtype),
        grid_spec=pltpu.PrefetchScalarGridSpec(
            num_scalar_prefetch=0,
            grid=(B, n_tiles),
            in_specs=[
                pl.BlockSpec((None, C, ts), lambda bidx, sidx: (bidx, 0, sidx)),
                pl.BlockSpec((OC, C), lambda bidx, sidx: (0, 0)),
                pl.BlockSpec((OC, 1), lambda bidx, sidx: (0, 0)),
            ],
            out_specs=pl.BlockSpec((None, OC, ts),
                                   lambda bidx, sidx: (bidx, 0, sidx)),
        ),
        compiler_params=pltpu.CompilerParams(
            dimension_semantics=("parallel", "parallel")),
        cost_estimate=cost,
    )(x2, w2, b2)

    return out.reshape(B, OC, D, H, W)


def ref_outconv(x, w, b):
    """Pure-JAX reference matching PyTorch Conv3d(in_ch, out_ch, 1) semantics."""
    dn = jax.lax.conv_dimension_numbers(x.shape, w.shape,
                                        ("NCDHW", "OIDHW", "NCDHW"))
    out = jax.lax.conv_general_dilated(
        x, w, window_strides=(1, 1, 1), padding=[(0, 0)] * 3,
        dimension_numbers=dn, precision=jax.lax.Precision.HIGHEST)
    return out + b.reshape(1, -1, 1, 1, 1)


if __name__ == "__main__":
    key = jax.random.PRNGKey(0)
    B, C, OC = 2, 4, 2          # in_ch=4, out_ch=2 (e.g. segmentation classes)
    D = H = W = 16
    K = 1

    k1, k2, k3 = jax.random.split(key, 3)
    x = jax.random.normal(k1, (B, C, D, H, W), dtype=jnp.float32)
    w = 0.1 * jax.random.normal(k2, (OC, C, K, K, K), dtype=jnp.float32)
    b = 0.1 * jax.random.normal(k3, (OC,), dtype=jnp.float32)

    out = jax.block_until_ready(jax.jit(outconv)(x, w, b))
    ref = ref_outconv(x, w, b)
    assert out.shape == (B, OC, D, H, W)
    assert jnp.max(jnp.abs(out - ref)) < 1e-3

    # Ragged spatial extent (S = 5*6*7 = 210, not a multiple of 128): handled
    # with a full-extent spatial block — no jnp.pad / post-slice HBM passes.
    xr = jax.random.normal(k1, (B, C, 5, 6, 7), dtype=jnp.float32)
    outr = jax.block_until_ready(jax.jit(outconv)(xr, w, b))
    refr = ref_outconv(xr, w, b)
    assert jnp.max(jnp.abs(outr - refr)) < 1e-3

    # NOTE: the module also defines Sigmoid/Softmax members but forward()
    # returns conv(x) only, so no activation is applied here.
    print("KERNEL_OK")
</pallas_src>

<mosaic_0001>
module attributes {stable_mosaic.version = 11 : i64} {
  func.func @outconv_kernel(%arg0: i32, %arg1: i32, %arg2: memref<1x4x2048xf32, #tpu.memory_space<vmem>>, %arg3: memref<2x4xf32, #tpu.memory_space<vmem>>, %arg4: memref<2x1xf32, #tpu.memory_space<vmem>>, %arg5: memref<1x2x2048xf32, #tpu.memory_space<vmem>>) attributes {dimension_semantics = [#tpu.dimension_semantics<parallel>, #tpu.dimension_semantics<parallel>], iteration_bounds = array<i64: 2, 2>, scalar_prefetch = 0 : i64, scratch_operands = 0 : i64, tpu.core_type = #tpu.core_type<tc>, window_params = [{transform_indices = @transform_0, window_bounds = array<i64: 1, 4, 2048>}, {pipeline_mode = #tpu.pipeline_mode<synchronous>, transform_indices = @transform_1, window_bounds = array<i64: 2, 4>}, {pipeline_mode = #tpu.pipeline_mode<synchronous>, transform_indices = @transform_2, window_bounds = array<i64: 2, 1>}, {transform_indices = @transform_3, window_bounds = array<i64: 1, 2, 2048>}]} {
    %c0 = arith.constant 0 : index
    %c0_0 = arith.constant 0 : index
    %0 = vector.load %arg3[%c0, %c0_0] : memref<2x4xf32, #tpu.memory_space<vmem>>, vector<2x4xf32>
    %c0_1 = arith.constant 0 : index
    %c0_2 = arith.constant 0 : index
    %c0_3 = arith.constant 0 : index
    %1 = vector.load %arg2[%c0_1, %c0_2, %c0_3] : memref<1x4x2048xf32, #tpu.memory_space<vmem>>, vector<1x4x2048xf32>
    %2 = vector.shape_cast %1 : vector<1x4x2048xf32> to vector<4x2048xf32>
    %cst = arith.constant dense<0.000000e+00> : vector<2x2048xf32>
    %3 = tpu.matmul %0, %2, %cst {dimension_numbers = #tpu.dot_dimension_numbers<[1], [0], [0], [1], [0, 0, 1, 1], [], []>} : vector<2x4xf32>, vector<4x2048xf32>, vector<2x2048xf32> -> vector<2x2048xf32>
    %c0_4 = arith.constant 0 : index
    %c0_5 = arith.constant 0 : index
    %4 = vector.load %arg4[%c0_4, %c0_5] : memref<2x1xf32, #tpu.memory_space<vmem>>, vector<2x1xf32>
    %5 = vector.broadcast %4 : vector<2x1xf32> to vector<2x2048xf32>
    %6 = arith.addf %3, %5 : vector<2x2048xf32>
    %c0_6 = arith.constant 0 : index
    %c0_7 = arith.constant 0 : index
    %c0_8 = arith.constant 0 : index
    %7 = vector.load %arg5[%c0_6, %c0_7, %c0_8] : memref<1x2x2048xf32, #tpu.memory_space<vmem>>, vector<1x2x2048xf32>
    %8 = vector.shape_cast %7 : vector<1x2x2048xf32> to vector<2x2048xf32>
    %9 = vector.shape_cast %6 : vector<2x2048xf32> to vector<1x2x2048xf32>
    tpu.vector_store %arg5[%c0_6, %c0_7, %c0_8], %9 {strides = array<i32>} : memref<1x2x2048xf32, #tpu.memory_space<vmem>>, vector<1x2x2048xf32>,
    return
  }
  func.func @transform_0(%arg0: i32, %arg1: i32) -> (i32, i32, i32) {
    %c0_i32 = arith.constant 0 : i32
    %c0_i32_0 = arith.constant 0 : i32
    return %arg0, %c0_i32, %arg1 : i32, i32, i32
  }
  func.func @transform_1(%arg0: i32, %arg1: i32) -> (i32, i32) {
    %c0_i32 = arith.constant 0 : i32
    %c0_i32_0 = arith.constant 0 : i32
    %c0_i32_1 = arith.constant 0 : i32
    return %c0_i32, %c0_i32_0 : i32, i32
  }
  func.func @transform_2(%arg0: i32, %arg1: i32) -> (i32, i32) {
    %c0_i32 = arith.constant 0 : i32
    %c0_i32_0 = arith.constant 0 : i32
    %c0_i32_1 = arith.constant 0 : i32
    return %c0_i32, %c0_i32_0 : i32, i32
  }
  func.func @transform_3(%arg0: i32, %arg1: i32) -> (i32, i32, i32) {
    %c0_i32 = arith.constant 0 : i32
    %c0_i32_0 = arith.constant 0 : i32
    return %arg0, %c0_i32, %arg1 : i32, i32, i32
  }
}

</mosaic_0001>

<llo_original>
// kernel: outconv.1
$region0: #{outconv.1}
  #allocation0 [shape = 'u32[]', space=smem, size = 0x4, offset = 0x4, fixed_abs, tag = 'smem constant byte address 0x4 - core index']
  #allocation1 [shape = 'u32[144,128]{1,0:T(1,128)}', space=vmem, size = 0x12000, scoped, tag = 'internal scratch']
  %s0 = inlined_call_operand.vmem [shape: f32[2,4,4096], index: 0, kind: input, shape index: {}]
  %s1 = inlined_call_operand.vmem [shape: f32[2,4], index: 1, kind: input, shape index: {}]
  %s2 = inlined_call_operand.vmem [shape: f32[2,1], index: 2, kind: input, shape index: {}]
  %s3 = inlined_call_operand.vmem [shape: f32[2,2,4096], index: 3, kind: output, shape index: {}]
  %s4 = sld [smem:[#allocation0]]
  $region45: #{outconv.1} parent=0
    _
  %s6 = ssub.s32 1, %s4
  %s7 = scalar_select 0, %s6, %s4
  loop: start=0, step=1, limit=6
  $region2: #{outconv.1} parent=0 // loop_pre_header
    _
  $region3: #{outconv.1} parent=0 // loop_header
    %s9 = sphi 0, %s13
    %p10 = scmp.ge.s32.totalorder %s9, 6
    %s16 = sphi 0, %s28
    %s17 = sphi 0, %s24
    %s18 = sphi 0, %s16
    %s19 = sphi 0, %s17
    %s20 = sphi 0, %s18
    %s21 = sphi 0, %s19
    %s33 = sphi 0, %s35
    %s36 = sphi 0, %s33
    %s37 = sphi 0, %s36
    %s53 = sphi 0, %s37
    %s57 = sphi 0, %s57
    %s59 = sphi 0, %s57
    %s60 = sphi 0, %s59
    %s74 = sphi 0, %s60
    %s78 = sphi 0, %s78
    %s80 = sphi 0, %s78
    %s81 = sphi 0, %s80
    %s95 = sphi 0, %s81
    %s103 = sphi 0, %s105
    %s106 = sphi 0, %s103
    %s107 = sphi 0, %s106
    %s123 = sphi 0, %s107
  $region4: #{outconv.1} parent=0 // loop_header_branch
    %12 = sbr.rel (%p10) target = $region8
  $region5: #{outconv.1} parent=0 // loop_body
    %s14 = ssub.s32 %s9, 1
    %s15 = ssub.s32 %s9, 2
    %s22 = sadd.s32 1, %s17
    %p23 = scmp.ge.s32.totalorder %s22, 2
    %s24 = scalar_select %p23, 0, %s22
    %s25 = sadd.s32 1, %s16
    %s26 = scalar_select %p23, %s25, %s16
    %p27 = scmp.ge.s32.totalorder %s26, 2
    %s28 = scalar_select %p27, 0, %s26
    %s29 = ssub.s32 %s16, %s28
    %s30 = ssub.s32 %s17, %s24
    %s31 = sor.u32 %s29, %s30
    %p32 = scmp.eq.s32.totalorder %s31, 0
    %s34 = sadd.s32 %s33, 1
    %s35 = scalar_select %p32, %s33, %s34
    %p38 = pneg %p32
    %p39 = scmp.eq.s32.totalorder %s9, 3
    %p40 = por %p38, %p39
    %p41 = scmp.ne.s32.totalorder %s33, %s36
    %p42 = scmp.eq.s32.totalorder %s9, 0
    %p43 = por %p41, %p42
    %p44 = scmp.ne.s32.totalorder %s33, %s36
    %p45 = scmp.eq.s32.totalorder %s14, 3
    %p46 = por %p44, %p45
    %p47 = scmp.ne.s32.totalorder %s36, %s37
    %p48 = scmp.eq.s32.totalorder %s14, 0
    %p49 = por %p47, %p48
    %p50 = scmp.ne.s32.totalorder %s36, %s37
    %p51 = scmp.eq.s32.totalorder %s15, 3
    %p52 = por %p50, %p51
    %p54 = scmp.ne.s32.totalorder %s37, %s53
    %p55 = scmp.eq.s32.totalorder %s15, 0
    %p56 = por %p54, %p55
    %s58 = sadd.s32 %s57, 1
    %p61 = scmp.eq.s32.totalorder %s9, 3
    %p62 = scmp.ne.s32.totalorder %s57, %s59
    %p63 = scmp.eq.s32.totalorder %s9, 0
    %p64 = por %p62, %p63
    %p65 = scmp.ne.s32.totalorder %s57, %s59
    %p66 = scmp.eq.s32.totalorder %s14, 3
    %p67 = por %p65, %p66
    %p68 = scmp.ne.s32.totalorder %s59, %s60
    %p69 = scmp.eq.s32.totalorder %s14, 0
    %p70 = por %p68, %p69
    %p71 = scmp.ne.s32.totalorder %s59, %s60
    %p72 = scmp.eq.s32.totalorder %s15, 3
    %p73 = por %p71, %p72
    %p75 = scmp.ne.s32.totalorder %s60, %s74
    %p76 = scmp.eq.s32.totalorder %s15, 0
    %p77 = por %p75, %p76
    %s79 = sadd.s32 %s78, 1
    %p82 = scmp.eq.s32.totalorder %s9, 3
    %p83 = scmp.ne.s32.totalorder %s78, %s80
    %p84 = scmp.eq.s32.totalorder %s9, 0
    %p85 = por %p83, %p84
    %p86 = scmp.ne.s32.totalorder %s78, %s80
    %p87 = scmp.eq.s32.totalorder %s14, 3
    %p88 = por %p86, %p87
    %p89 = scmp.ne.s32.totalorder %s80, %s81
    %p90 = scmp.eq.s32.totalorder %s14, 0
    %p91 = por %p89, %p90
    %p92 = scmp.ne.s32.totalorder %s80, %s81
    %p93 = scmp.eq.s32.totalorder %s15, 3
    %p94 = por %p92, %p93
    %p96 = scmp.ne.s32.totalorder %s81, %s95
    %p97 = scmp.eq.s32.totalorder %s15, 0
    %p98 = por %p96, %p97
    %s99 = ssub.s32 %s16, %s28
    %s100 = ssub.s32 %s17, %s24
    %s101 = sor.u32 %s99, %s100
    %p102 = scmp.eq.s32.totalorder %s101, 0
    %s104 = sadd.s32 %s103, 1
    %s105 = scalar_select %p102, %s103, %s104
    %p108 = pneg %p102
    %p109 = scmp.eq.s32.totalorder %s9, 3
    %p110 = por %p108, %p109
    %p111 = scmp.ne.s32.totalorder %s103, %s106
    %p112 = scmp.eq.s32.totalorder %s9, 0
    %p113 = por %p111, %p112
    %p114 = scmp.ne.s32.totalorder %s103, %s106
    %p115 = scmp.eq.s32.totalorder %s14, 3
    %p116 = por %p114, %p115
    %p117 = scmp.ne.s32.totalorder %s106, %s107
    %p118 = scmp.eq.s32.totalorder %s14, 0
    %p119 = por %p117, %p118
    %p120 = scmp.ne.s32.totalorder %s106, %s107
    %p121 = scmp.eq.s32.totalorder %s15, 3
    %p122 = por %p120, %p121
    %p124 = scmp.ne.s32.totalorder %s107, %s123
    %p125 = scmp.eq.s32.totalorder %s15, 0
    %p126 = por %p124, %p125
    %p127 = scmp.le.s32.totalorder 1, %s9
    %p128 = scmp.lt.s32.totalorder %s9, 5
    %p129 = pnand %p127, %p128
    %p130 = pneg %p129
    // Predicated region
    $region9: #{outconv.1} parent=5 // pred_check
      _
    $region10: #{outconv.1} parent=5 // pred_check_branch
      %132 = sbr.rel (%p129) target = $region12
    $region11: #{outconv.1} parent=5 // pred_region
      %s133 = ssub.s32 %s9, 1
      // Predicated region
      $region13: #{outconv.1} parent=11 // pred_check
        %p134 = pneg %p70
      $region14: #{outconv.1} parent=11 // pred_check_branch
        %136 = sbr.rel (%p134) target = $region16
      $region15: #{outconv.1} parent=11 // pred_region
        _
      $region16: #{outconv.1} parent=11 // pred_fallthru
        _
      // Predicated region
      $region17: #{outconv.1} parent=11 // pred_check
        %p137 = pneg %p91
      $region18: #{outconv.1} parent=11 // pred_check_branch
        %139 = sbr.rel (%p137) target = $region20
      $region19: #{outconv.1} parent=11 // pred_region
        _
      $region20: #{outconv.1} parent=11 // pred_fallthru
        _
    $region12: #{outconv.1} parent=5 // pred_fallthru
      _
    %p140 = scmp.lt.s32.totalorder %s9, 4
    // Predicated region
    $region21: #{outconv.1} parent=5 // pred_check
      %p141 = pneg %p140
    $region22: #{outconv.1} parent=5 // pred_check_branch
      %143 = sbr.rel (%p141) target = $region24
    $region23: #{outconv.1} parent=5 // pred_region
      // Predicated region
      $region25: #{outconv.1} parent=23 // pred_check
        %p144 = pneg %p43
      $region26: #{outconv.1} parent=23 // pred_check_branch
        %146 = sbr.rel (%p144) target = $region28
      $region27: #{outconv.1} parent=23 // pred_region
        %s147 = smul.u32 16, %s17
        %p148 = scmp.lt.s32.totalorder %s16, 1
        %s149 = scalar_select %p148, %s16, 1
        %p150 = scmp.lt.s32.totalorder %s147, 31
        %s151 = scalar_select %p150, %s147, 31
        %s152 = smul.addr %s149, 32
        %s153 = sadd.s32 %s151, %s152
        %s154 = smul.addr %s153, 4
        %s155 = scalar_lea.vmem %s0, %s154
        %s156 = smul.u32 16, %s17
      $region28: #{outconv.1} parent=23 // pred_fallthru
        _
    $region24: #{outconv.1} parent=5 // pred_fallthru
      _
    %p157 = scmp.le.s32.totalorder 1, %s9
    %p158 = scmp.lt.s32.totalorder %s9, 5
    %p159 = pnand %p157, %p158
    %p160 = pneg %p159
    // Predicated region
    $region29: #{outconv.1} parent=5 // pred_check
      _
    $region30: #{outconv.1} parent=5 // pred_check_branch
      %162 = sbr.rel (%p159) target = $region32
    $region31: #{outconv.1} parent=5 // pred_region
      %s163 = ssub.s32 %s9, 1
      %s164 = smul.u32 16, %s19
      %p165 = scmp.lt.s32.totalorder %s18, 1
      %s166 = scalar_select %p165, %s18, 1
      %p167 = scmp.lt.s32.totalorder %s164, 31
      %s168 = scalar_select %p167, %s164, 31
      %s169 = smul.addr %s166, 32
      %s170 = sadd.s32 %s168, %s169
      %s171 = smul.addr %s170, 4
      %s172 = scalar_lea.vmem %s0, %s171
      %p173 = pneg %p49
      %p174 = pneg %p46
      %p175 = pneg %p70
      %p176 = pneg %p67
      %p177 = pneg %p91
      %p178 = pneg %p88
      %p179 = pneg %p119
      %p180 = pneg %p116
      %s181 = smul.u32 16, %s19
      %p182 = scmp.lt.s32.totalorder %s18, 1
      %s183 = scalar_select %p182, %s18, 1
      %p184 = scmp.lt.s32.totalorder %s181, 31
      %s185 = scalar_select %p184, %s181, 31
      %s186 = smul.addr %s183, 32
      %s187 = sadd.s32 %s185, %s186
      %s188 = smul.addr %s187, 2
      %s189 = scalar_lea.vmem %s3, %s188
      %s190 = smul.u32 16, %s19
      %p191 = scmp.lt.s32.totalorder %s18, 1
      %s192 = scalar_select %p191, %s18, 1
      %p193 = scmp.lt.s32.totalorder %s190, 31
      %s194 = scalar_select %p193, %s190, 31
      %s195 = smul.addr %s192, 32
      %s196 = sadd.s32 %s194, %s195
      %s197 = smul.addr %s196, 4
      %s198 = scalar_lea.vmem %s0, %s197
      %s199 = smul.u32 16, %s19
      %s200 = smul.u32 16, %s19
      %p201 = scmp.lt.s32.totalorder %s18, 1
      %s202 = scalar_select %p201, %s18, 1
      %p203 = scmp.lt.s32.totalorder %s200, 31
      %s204 = scalar_select %p203, %s200, 31
      %s205 = smul.addr %s202, 32
      %s206 = sadd.s32 %s204, %s205
      %s207 = smul.addr %s206, 2
      %s208 = scalar_lea.vmem %s3, %s207
      %s209 = smul.u32 16, %s19
      %v210 = vld [vmem:[%s1] sm:$0x3]
      %v211 = vld [vmem:[%s198] sm:$0xff]
      %v212 = vld [vmem:[%s198 + $0x8] sm:$0xff]
      %v213 = vld [vmem:[%s198 + $0x10] sm:$0xff]
      %v214 = vld [vmem:[%s198 + $0x18] sm:$0xff]
      %v215 = vld [vmem:[%s198 + $0x20] sm:$0xff]
      %v216 = vld [vmem:[%s198 + $0x28] sm:$0xff]
      %v217 = vld [vmem:[%s198 + $0x30] sm:$0xff]
      %v218 = vld [vmem:[%s198 + $0x38] sm:$0xff]
      %v219 = vld [vmem:[%s2] sm:$0x3]
      %221 = vset.pattern.permute.xlu0 0
      %222 = vperm.xlu0 %221, %v219
      %v223 = vpop.permute.xlu0 %222
      %v233 = vcombine.high %v211, %v211
      %v234 = vcombine.high %v212, %v212
      %v235 = vcombine.high %v213, %v213
      %v236 = vcombine.high %v214, %v214
      %v237 = vcombine.high %v215, %v215
      %v238 = vcombine.high %v216, %v216
      %v239 = vcombine.high %v217, %v217
      %v240 = vcombine.high %v218, %v218
      %vm241 = vcmask 31744
      %v243 = vsel %vm241, %v210, 0
      %vm245 = vcmask 1043456
      %v246 = vsel %vm245, %v211, 0
      %v248 = vsel %vm245, %v233, 0
      %v250 = vsel %vm245, %v212, 0
      %v252 = vsel %vm245, %v234, 0
      %v254 = vsel %vm245, %v213, 0
      %v256 = vsel %vm245, %v235, 0
      %v258 = vsel %vm245, %v214, 0
      %v260 = vsel %vm245, %v236, 0
      %v262 = vsel %vm245, %v215, 0
      %v264 = vsel %vm245, %v237, 0
      %v266 = vsel %vm245, %v216, 0
      %v268 = vsel %vm245, %v238, 0
      %v270 = vsel %vm245, %v217, 0
      %v272 = vsel %vm245, %v239, 0
      %v274 = vsel %vm245, %v218, 0
      %v276 = vsel %vm245, %v240, 0
      %278 = vmatprep.subr.mxu0 %v248
      %279 = vmatpush1.msra.mxu0 %v246
      %280 = vmatprep.subr.mxu0 0.0
      %281 = vmatpush1.msra.mxu0 0.0
      %282 = vmatprep.subr.mxu0 0.0
      %283 = vmatpush1.msra.mxu0 0.0
      %284 = vmatprep.subr.mxu0 0.0
      %285 = vmatpush1.msra.mxu0 0.0
      %286 = vmatprep.subr.mxu0 0.0
      %287 = vmatpush1.msra.mxu0 0.0
      %288 = vmatprep.subr.mxu0 0.0
      %289 = vmatpush1.msra.mxu0 0.0
      %290 = vmatprep.subr.mxu0 0.0
      %291 = vmatpush1.msra.mxu0 0.0
      %292 = vmatprep.subr.mxu0 0.0
      %293 = vmatpush1.msra.mxu0 0.0
      %294 = vmatprep.subr.mxu0 0.0
      %295 = vmatpush1.msra.mxu0 0.0
      %296 = vmatprep.subr.mxu0 0.0
      %297 = vmatpush1.msra.mxu0 0.0
      %298 = vmatprep.subr.mxu0 0.0
      %299 = vmatpush1.msra.mxu0 0.0
      %300 = vmatprep.subr.mxu0 0.0
      %301 = vmatpush1.msra.mxu0 0.0
      %302 = vmatprep.subr.mxu0 0.0
      %303 = vmatpush1.msra.mxu0 0.0
      %304 = vmatprep.subr.mxu0 0.0
      %305 = vmatpush1.msra.mxu0 0.0
      %306 = vmatprep.subr.mxu0 0.0
      %307 = vmatpush1.msra.mxu0 0.0
      %308 = vmatprep.subr.mxu0 0.0
      %309 = vmatpush1.msra.mxu0 0.0
      %310 = vmatprep.subr.mxu0 0.0
      %311 = vmatpush1.msra.mxu0 0.0
      %312 = vmatprep.subr.mxu0 0.0
      %313 = vmatpush1.msra.mxu0 0.0
      %314 = vmatprep.subr.mxu0 0.0
      %315 = vmatpush1.msra.mxu0 0.0
      %316 = vmatprep.subr.mxu0 0.0
      %317 = vmatpush1.msra.mxu0 0.0
      %318 = vmatprep.subr.mxu0 0.0
      %319 = vmatpush1.msra.mxu0 0.0
      %320 = vmatprep.subr.mxu0 0.0
      %321 = vmatpush1.msra.mxu0 0.0
      %322 = vmatprep.subr.mxu0 0.0
      %323 = vmatpush1.msra.mxu0 0.0
      %324 = vmatprep.subr.mxu0 0.0
      %325 = vmatpush1.msra.mxu0 0.0
      %326 = vmatprep.subr.mxu0 0.0
      %327 = vmatpush1.msra.mxu0 0.0
      %328 = vmatprep.subr.mxu0 0.0
      %329 = vmatpush1.msra.mxu0 0.0
      %330 = vmatprep.subr.mxu0 0.0
      %331 = vmatpush1.msra.mxu0 0.0
      %332 = vmatprep.subr.mxu0 0.0
      %333 = vmatpush1.msra.mxu0 0.0
      %334 = vmatprep.subr.mxu0 0.0
      %335 = vmatpush1.msra.mxu0 0.0
      %336 = vmatprep.subr.mxu0 0.0
      %337 = vmatpush1.msra.mxu0 0.0
      %338 = vmatprep.subr.mxu0 0.0
      %339 = vmatpush1.msra.mxu0 0.0
      %340 = vmatprep.subr.mxu0 0.0
      %341 = vmatpush1.msra.mxu0 0.0
      %342 = vmatprep.mubr.f32.mxu0 0.0
      %343 = vmatmul.mubr.f32.gmra.mrb[0].mxu0 %v243
      %v344 = vpop.f32.mrb[0].mxu0
      %v345 = vadd.f32 %v223, %v344
      %v346 = vpop.f32.mrb[0].mxu0
      %v347 = vadd.f32 %v223, %v346
      %348 = vdwg.mxu0
      %349 = vmatprep.subr.mxu0 %v252
      %350 = vmatpush1.msra.mxu0 %v250
      %351 = vmatprep.subr.mxu0 0.0
      %352 = vmatpush1.msra.mxu0 0.0
      %353 = vmatprep.subr.mxu0 0.0
      %354 = vmatpush1.msra.mxu0 0.0
      %355 = vmatprep.subr.mxu0 0.0
      %356 = vmatpush1.msra.mxu0 0.0
      %357 = vmatprep.subr.mxu0 0.0
      %358 = vmatpush1.msra.mxu0 0.0
      %359 = vmatprep.subr.mxu0 0.0
      %360 = vmatpush1.msra.mxu0 0.0
      %361 = vmatprep.subr.mxu0 0.0
      %362 = vmatpush1.msra.mxu0 0.0
      %363 = vmatprep.subr.mxu0 0.0
      %364 = vmatpush1.msra.mxu0 0.0
      %365 = vmatprep.subr.mxu0 0.0
      %366 = vmatpush1.msra.mxu0 0.0
      %367 = vmatprep.subr.mxu0 0.0
      %368 = vmatpush1.msra.mxu0 0.0
      %369 = vmatprep.subr.mxu0 0.0
      %370 = vmatpush1.msra.mxu0 0.0
      %371 = vmatprep.subr.mxu0 0.0
      %372 = vmatpush1.msra.mxu0 0.0
      %373 = vmatprep.subr.mxu0 0.0
      %374 = vmatpush1.msra.mxu0 0.0
      %375 = vmatprep.subr.mxu0 0.0
      %376 = vmatpush1.msra.mxu0 0.0
      %377 = vmatprep.subr.mxu0 0.0
      %378 = vmatpush1.msra.mxu0 0.0
      %379 = vmatprep.subr.mxu0 0.0
      %380 = vmatpush1.msra.mxu0 0.0
      %381 = vmatprep.subr.mxu0 0.0
      %382 = vmatpush1.msra.mxu0 0.0
      %383 = vmatprep.subr.mxu0 0.0
      %384 = vmatpush1.msra.mxu0 0.0
      %385 = vmatprep.subr.mxu0 0.0
      %386 = vmatpush1.msra.mxu0 0.0
      %387 = vmatprep.subr.mxu0 0.0
      %388 = vmatpush1.msra.mxu0 0.0
      %389 = vmatprep.subr.mxu0 0.0
      %390 = vmatpush1.msra.mxu0 0.0
      %391 = vmatprep.subr.mxu0 0.0
      %392 = vmatpush1.msra.mxu0 0.0
      %393 = vmatprep.subr.mxu0 0.0
      %394 = vmatpush1.msra.mxu0 0.0
      %395 = vmatprep.subr.mxu0 0.0
      %396 = vmatpush1.msra.mxu0 0.0
      %397 = vmatprep.subr.mxu0 0.0
      %398 = vmatpush1.msra.mxu0 0.0
      %399 = vmatprep.subr.mxu0 0.0
      %400 = vmatpush1.msra.mxu0 0.0
      %401 = vmatprep.subr.mxu0 0.0
      %402 = vmatpush1.msra.mxu0 0.0
      %403 = vmatprep.subr.mxu0 0.0
      %404 = vmatpush1.msra.mxu0 0.0
      %405 = vmatprep.subr.mxu0 0.0
      %406 = vmatpush1.msra.mxu0 0.0
      %407 = vmatprep.subr.mxu0 0.0
      %408 = vmatpush1.msra.mxu0 0.0
      %409 = vmatprep.subr.mxu0 0.0
      %410 = vmatpush1.msra.mxu0 0.0
      %411 = vmatprep.subr.mxu0 0.0
      %412 = vmatpush1.msra.mxu0 0.0
      %413 = vmatprep.mubr.f32.mxu0 0.0
      %414 = vmatmul.mubr.f32.gmra.mrb[0].mxu0 %v243
      %v415 = vpop.f32.mrb[0].mxu0
      %v416 = vadd.f32 %v223, %v415
      %v417 = vpop.f32.mrb[0].mxu0
      %v418 = vadd.f32 %v223, %v417
      %419 = vdwg.mxu0
      %420 = vmatprep.subr.mxu0 %v256
      %421 = vmatpush1.msra.mxu0 %v254
      %422 = vmatprep.subr.mxu0 0.0
      %423 = vmatpush1.msra.mxu0 0.0
      %424 = vmatprep.subr.mxu0 0.0
      %425 = vmatpush1.msra.mxu0 0.0
      %426 = vmatprep.subr.mxu0 0.0
      %427 = vmatpush1.msra.mxu0 0.0
      %428 = vmatprep.subr.mxu0 0.0
      %429 = vmatpush1.msra.mxu0 0.0
      %430 = vmatprep.subr.mxu0 0.0
      %431 = vmatpush1.msra.mxu0 0.0
      %432 = vmatprep.subr.mxu0 0.0
      %433 = vmatpush1.msra.mxu0 0.0
      %434 = vmatprep.subr.mxu0 0.0
      %435 = vmatpush1.msra.mxu0 0.0
      %436 = vmatprep.subr.mxu0 0.0
      %437 = vmatpush1.msra.mxu0 0.0
      %438 = vmatprep.subr.mxu0 0.0
      %439 = vmatpush1.msra.mxu0 0.0
      %440 = vmatprep.subr.mxu0 0.0
      %441 = vmatpush1.msra.mxu0 0.0
      %442 = vmatprep.subr.mxu0 0.0
      %443 = vmatpush1.msra.mxu0 0.0
      %444 = vmatprep.subr.mxu0 0.0
      %445 = vmatpush1.msra.mxu0 0.0
      %446 = vmatprep.subr.mxu0 0.0
      %447 = vmatpush1.msra.mxu0 0.0
      %448 = vmatprep.subr.mxu0 0.0
      %449 = vmatpush1.msra.mxu0 0.0
      %450 = vmatprep.subr.mxu0 0.0
      %451 = vmatpush1.msra.mxu0 0.0
      %452 = vmatprep.subr.mxu0 0.0
      %453 = vmatpush1.msra.mxu0 0.0
      %454 = vmatprep.subr.mxu0 0.0
      %455 = vmatpush1.msra.mxu0 0.0
      %456 = vmatprep.subr.mxu0 0.0
      %457 = vmatpush1.msra.mxu0 0.0
      %458 = vmatprep.subr.mxu0 0.0
      %459 = vmatpush1.msra.mxu0 0.0
      %460 = vmatprep.subr.mxu0 0.0
      %461 = vmatpush1.msra.mxu0 0.0
      %462 = vmatprep.subr.mxu0 0.0
      %463 = vmatpush1.msra.mxu0 0.0
      %464 = vmatprep.subr.mxu0 0.0
      %465 = vmatpush1.msra.mxu0 0.0
      %466 = vmatprep.subr.mxu0 0.0
      %467 = vmatpush1.msra.mxu0 0.0
      %468 = vmatprep.subr.mxu0 0.0
      %469 = vmatpush1.msra.mxu0 0.0
      %470 = vmatprep.subr.mxu0 0.0
      %471 = vmatpush1.msra.mxu0 0.0
      %472 = vmatprep.subr.mxu0 0.0
      %473 = vmatpush1.msra.mxu0 0.0
      %474 = vmatprep.subr.mxu0 0.0
      %475 = vmatpush1.msra.mxu0 0.0
      %476 = vmatprep.subr.mxu0 0.0
      %477 = vmatpush1.msra.mxu0 0.0
      %478 = vmatprep.subr.mxu0 0.0
      %479 = vmatpush1.msra.mxu0 0.0
      %480 = vmatprep.subr.mxu0 0.0
      %481 = vmatpush1.msra.mxu0 0.0
      %482 = vmatprep.subr.mxu0 0.0
      %483 = vmatpush1.msra.mxu0 0.0
      %484 = vmatprep.mubr.f32.mxu0 0.0
      %485 = vmatmul.mubr.f32.gmra.mrb[0].mxu0 %v243
      %v486 = vpop.f32.mrb[0].mxu0
      %v487 = vadd.f32 %v223, %v486
      %v488 = vpop.f32.mrb[0].mxu0
      %v489 = vadd.f32 %v223, %v488
      %490 = vdwg.mxu0
      %491 = vmatprep.subr.mxu0 %v260
      %492 = vmatpush1.msra.mxu0 %v258
      %493 = vmatprep.subr.mxu0 0.0
      %494 = vmatpush1.msra.mxu0 0.0
      %495 = vmatprep.subr.mxu0 0.0
      %496 = vmatpush1.msra.mxu0 0.0
      %497 = vmatprep.subr.mxu0 0.0
      %498 = vmatpush1.msra.mxu0 0.0
      %499 = vmatprep.subr.mxu0 0.0
      %500 = vmatpush1.msra.mxu0 0.0
      %501 = vmatprep.subr.mxu0 0.0
      %502 = vmatpush1.msra.mxu0 0.0
      %503 = vmatprep.subr.mxu0 0.0
      %504 = vmatpush1.msra.mxu0 0.0
      %505 = vmatprep.subr.mxu0 0.0
      %506 = vmatpush1.msra.mxu0 0.0
      %507 = vmatprep.subr.mxu0 0.0
      %508 = vmatpush1.msra.mxu0 0.0
      %509 = vmatprep.subr.mxu0 0.0
      %510 = vmatpush1.msra.mxu0 0.0
      %511 = vmatprep.subr.mxu0 0.0
      %512 = vmatpush1.msra.mxu0 0.0
      %513 = vmatprep.subr.mxu0 0.0
      %514 = vmatpush1.msra.mxu0 0.0
      %515 = vmatprep.subr.mxu0 0.0
      %516 = vmatpush1.msra.mxu0 0.0
      %517 = vmatprep.subr.mxu0 0.0
      %518 = vmatpush1.msra.mxu0 0.0
      %519 = vmatprep.subr.mxu0 0.0
      %520 = vmatpush1.msra.mxu0 0.0
      %521 = vmatprep.subr.mxu0 0.0
      %522 = vmatpush1.msra.mxu0 0.0
      %523 = vmatprep.subr.mxu0 0.0
      %524 = vmatpush1.msra.mxu0 0.0
      %525 = vmatprep.subr.mxu0 0.0
      %526 = vmatpush1.msra.mxu0 0.0
      %527 = vmatprep.subr.mxu0 0.0
      %528 = vmatpush1.msra.mxu0 0.0
      %529 = vmatprep.subr.mxu0 0.0
      %530 = vmatpush1.msra.mxu0 0.0
      %531 = vmatprep.subr.mxu0 0.0
      %532 = vmatpush1.msra.mxu0 0.0
      %533 = vmatprep.subr.mxu0 0.0
      %534 = vmatpush1.msra.mxu0 0.0
      %535 = vmatprep.subr.mxu0 0.0
      %536 = vmatpush1.msra.mxu0 0.0
      %537 = vmatprep.subr.mxu0 0.0
      %538 = vmatpush1.msra.mxu0 0.0
      %539 = vmatprep.subr.mxu0 0.0
      %540 = vmatpush1.msra.mxu0 0.0
      %541 = vmatprep.subr.mxu0 0.0
      %542 = vmatpush1.msra.mxu0 0.0
      %543 = vmatprep.subr.mxu0 0.0
      %544 = vmatpush1.msra.mxu0 0.0
      %545 = vmatprep.subr.mxu0 0.0
      %546 = vmatpush1.msra.mxu0 0.0
      %547 = vmatprep.subr.mxu0 0.0
      %548 = vmatpush1.msra.mxu0 0.0
      %549 = vmatprep.subr.mxu0 0.0
      %550 = vmatpush1.msra.mxu0 0.0
      %551 = vmatprep.subr.mxu0 0.0
      %552 = vmatpush1.msra.mxu0 0.0
      %553 = vmatprep.subr.mxu0 0.0
      %554 = vmatpush1.msra.mxu0 0.0
      %555 = vmatprep.mubr.f32.mxu0 0.0
      %556 = vmatmul.mubr.f32.gmra.mrb[0].mxu0 %v243
      %v557 = vpop.f32.mrb[0].mxu0
      %v558 = vadd.f32 %v223, %v557
      %v559 = vpop.f32.mrb[0].mxu0
      %v560 = vadd.f32 %v223, %v559
      %561 = vdwg.mxu0
      %562 = vmatprep.subr.mxu0 %v264
      %563 = vmatpush1.msra.mxu0 %v262
      %564 = vmatprep.subr.mxu0 0.0
      %565 = vmatpush1.msra.mxu0 0.0
      %566 = vmatprep.subr.mxu0 0.0
      %567 = vmatpush1.msra.mxu0 0.0
      %568 = vmatprep.subr.mxu0 0.0
      %569 = vmatpush1.msra.mxu0 0.0
      %570 = vmatprep.subr.mxu0 0.0
      %571 = vmatpush1.msra.mxu0 0.0
      %572 = vmatprep.subr.mxu0 0.0
      %573 = vmatpush1.msra.mxu0 0.0
      %574 = vmatprep.subr.mxu0 0.0
      %575 = vmatpush1.msra.mxu0 0.0
      %576 = vmatprep.subr.mxu0 0.0
      %577 = vmatpush1.msra.mxu0 0.0
      %578 = vmatprep.subr.mxu0 0.0
      %579 = vmatpush1.msra.mxu0 0.0
      %580 = vmatprep.subr.mxu0 0.0
      %581 = vmatpush1.msra.mxu0 0.0
      %582 = vmatprep.subr.mxu0 0.0
      %583 = vmatpush1.msra.mxu0 0.0
      %584 = vmatprep.subr.mxu0 0.0
      %585 = vmatpush1.msra.mxu0 0.0
      %586 = vmatprep.subr.mxu0 0.0
      %587 = vmatpush1.msra.mxu0 0.0
      %588 = vmatprep.subr.mxu0 0.0
      %589 = vmatpush1.msra.mxu0 0.0
      %590 = vmatprep.subr.mxu0 0.0
      %591 = vmatpush1.msra.mxu0 0.0
      %592 = vmatprep.subr.mxu0 0.0
      %593 = vmatpush1.msra.mxu0 0.0
      %594 = vmatprep.subr.mxu0 0.0
      %595 = vmatpush1.msra.mxu0 0.0
      %596 = vmatprep.subr.mxu0 0.0
      %597 = vmatpush1.msra.mxu0 0.0
      %598 = vmatprep.subr.mxu0 0.0
      %599 = vmatpush1.msra.mxu0 0.0
      %600 = vmatprep.subr.mxu0 0.0
      %601 = vmatpush1.msra.mxu0 0.0
      %602 = vmatprep.subr.mxu0 0.0
      %603 = vmatpush1.msra.mxu0 0.0
      %604 = vmatprep.subr.mxu0 0.0
      %605 = vmatpush1.msra.mxu0 0.0
      %606 = vmatprep.subr.mxu0 0.0
      %607 = vmatpush1.msra.mxu0 0.0
      %608 = vmatprep.subr.mxu0 0.0
      %609 = vmatpush1.msra.mxu0 0.0
      %610 = vmatprep.subr.mxu0 0.0
      %611 = vmatpush1.msra.mxu0 0.0
      %612 = vmatprep.subr.mxu0 0.0
      %613 = vmatpush1.msra.mxu0 0.0
      %614 = vmatprep.subr.mxu0 0.0
      %615 = vmatpush1.msra.mxu0 0.0
      %616 = vmatprep.subr.mxu0 0.0
      %617 = vmatpush1.msra.mxu0 0.0
      %618 = vmatprep.subr.mxu0 0.0
      %619 = vmatpush1.msra.mxu0 0.0
      %620 = vmatprep.subr.mxu0 0.0
      %621 = vmatpush1.msra.mxu0 0.0
      %622 = vmatprep.subr.mxu0 0.0
      %623 = vmatpush1.msra.mxu0 0.0
      %624 = vmatprep.subr.mxu0 0.0
      %625 = vmatpush1.msra.mxu0 0.0
      %626 = vmatprep.mubr.f32.mxu0 0.0
      %627 = vmatmul.mubr.f32.gmra.mrb[0].mxu0 %v243
      %v628 = vpop.f32.mrb[0].mxu0
      %v629 = vadd.f32 %v223, %v628
      %v630 = vpop.f32.mrb[0].mxu0
      %v631 = vadd.f32 %v223, %v630
      %632 = vdwg.mxu0
      %633 = vmatprep.subr.mxu0 %v268
      %634 = vmatpush1.msra.mxu0 %v266
      %635 = vmatprep.subr.mxu0 0.0
      %636 = vmatpush1.msra.mxu0 0.0
      %637 = vmatprep.subr.mxu0 0.0
      %638 = vmatpush1.msra.mxu0 0.0
      %639 = vmatprep.subr.mxu0 0.0
      %640 = vmatpush1.msra.mxu0 0.0
      %641 = vmatprep.subr.mxu0 0.0
      %642 = vmatpush1.msra.mxu0 0.0
      %643 = vmatprep.subr.mxu0 0.0
      %644 = vmatpush1.msra.mxu0 0.0
      %645 = vmatprep.subr.mxu0 0.0
      %646 = vmatpush1.msra.mxu0 0.0
      %647 = vmatprep.subr.mxu0 0.0
      %648 = vmatpush1.msra.mxu0 0.0
      %649 = vmatprep.subr.mxu0 0.0
      %650 = vmatpush1.msra.mxu0 0.0
      %651 = vmatprep.subr.mxu0 0.0
      %652 = vmatpush1.msra.mxu0 0.0
      %653 = vmatprep.subr.mxu0 0.0
      %654 = vmatpush1.msra.mxu0 0.0
      %655 = vmatprep.subr.mxu0 0.0
      %656 = vmatpush1.msra.mxu0 0.0
      %657 = vmatprep.subr.mxu0 0.0
      %658 = vmatpush1.msra.mxu0 0.0
      %659 = vmatprep.subr.mxu0 0.0
      %660 = vmatpush1.msra.mxu0 0.0
      %661 = vmatprep.subr.mxu0 0.0
      %662 = vmatpush1.msra.mxu0 0.0
      %663 = vmatprep.subr.mxu0 0.0
      %664 = vmatpush1.msra.mxu0 0.0
      %665 = vmatprep.subr.mxu0 0.0
      %666 = vmatpush1.msra.mxu0 0.0
      %667 = vmatprep.subr.mxu0 0.0
      %668 = vmatpush1.msra.mxu0 0.0
      %669 = vmatprep.subr.mxu0 0.0
      %670 = vmatpush1.msra.mxu0 0.0
      %671 = vmatprep.subr.mxu0 0.0
      %672 = vmatpush1.msra.mxu0 0.0
      %673 = vmatprep.subr.mxu0 0.0
      %674 = vmatpush1.msra.mxu0 0.0
      %675 = vmatprep.subr.mxu0 0.0
      %676 = vmatpush1.msra.mxu0 0.0
      %677 = vmatprep.subr.mxu0 0.0
      %678 = vmatpush1.msra.mxu0 0.0
      %679 = vmatprep.subr.mxu0 0.0
      %680 = vmatpush1.msra.mxu0 0.0
      %681 = vmatprep.subr.mxu0 0.0
      %682 = vmatpush1.msra.mxu0 0.0
      %683 = vmatprep.subr.mxu0 0.0
      %684 = vmatpush1.msra.mxu0 0.0
      %685 = vmatprep.subr.mxu0 0.0
      %686 = vmatpush1.msra.mxu0 0.0
      %687 = vmatprep.subr.mxu0 0.0
      %688 = vmatpush1.msra.mxu0 0.0
      %689 = vmatprep.subr.mxu0 0.0
      %690 = vmatpush1.msra.mxu0 0.0
      %691 = vmatprep.subr.mxu0 0.0
      %692 = vmatpush1.msra.mxu0 0.0
      %693 = vmatprep.subr.mxu0 0.0
      %694 = vmatpush1.msra.mxu0 0.0
      %695 = vmatprep.subr.mxu0 0.0
      %696 = vmatpush1.msra.mxu0 0.0
      %697 = vmatprep.mubr.f32.mxu0 0.0
      %698 = vmatmul.mubr.f32.gmra.mrb[0].mxu0 %v243
      %v699 = vpop.f32.mrb[0].mxu0
      %v700 = vadd.f32 %v223, %v699
      %v701 = vpop.f32.mrb[0].mxu0
      %v702 = vadd.f32 %v223, %v701
      %703 = vdwg.mxu0
      %704 = vmatprep.subr.mxu0 %v272
      %705 = vmatpush1.msra.mxu0 %v270
      %706 = vmatprep.subr.mxu0 0.0
      %707 = vmatpush1.msra.mxu0 0.0
      %708 = vmatprep.subr.mxu0 0.0
      %709 = vmatpush1.msra.mxu0 0.0
      %710 = vmatprep.subr.mxu0 0.0
      %711 = vmatpush1.msra.mxu0 0.0
      %712 = vmatprep.subr.mxu0 0.0
      %713 = vmatpush1.msra.mxu0 0.0
      %714 = vmatprep.subr.mxu0 0.0
      %715 = vmatpush1.msra.mxu0 0.0
      %716 = vmatprep.subr.mxu0 0.0
      %717 = vmatpush1.msra.mxu0 0.0
      %718 = vmatprep.subr.mxu0 0.0
      %719 = vmatpush1.msra.mxu0 0.0
      %720 = vmatprep.subr.mxu0 0.0
      %721 = vmatpush1.msra.mxu0 0.0
      %722 = vmatprep.subr.mxu0 0.0
      %723 = vmatpush1.msra.mxu0 0.0
      %724 = vmatprep.subr.mxu0 0.0
      %725 = vmatpush1.msra.mxu0 0.0
      %726 = vmatprep.subr.mxu0 0.0
      %727 = vmatpush1.msra.mxu0 0.0
      %728 = vmatprep.subr.mxu0 0.0
      %729 = vmatpush1.msra.mxu0 0.0
      %730 = vmatprep.subr.mxu0 0.0
      %731 = vmatpush1.msra.mxu0 0.0
      %732 = vmatprep.subr.mxu0 0.0
      %733 = vmatpush1.msra.mxu0 0.0
      %734 = vmatprep.subr.mxu0 0.0
      %735 = vmatpush1.msra.mxu0 0.0
      %736 = vmatprep.subr.mxu0 0.0
      %737 = vmatpush1.msra.mxu0 0.0
      %738 = vmatprep.subr.mxu0 0.0
      %739 = vmatpush1.msra.mxu0 0.0
      %740 = vmatprep.subr.mxu0 0.0
      %741 = vmatpush1.msra.mxu0 0.0
      %742 = vmatprep.subr.mxu0 0.0
      %743 = vmatpush1.msra.mxu0 0.0
      %744 = vmatprep.subr.mxu0 0.0
      %745 = vmatpush1.msra.mxu0 0.0
      %746 = vmatprep.subr.mxu0 0.0
      %747 = vmatpush1.msra.mxu0 0.0
      %748 = vmatprep.subr.mxu0 0.0
      %749 = vmatpush1.msra.mxu0 0.0
      %750 = vmatprep.subr.mxu0 0.0
      %751 = vmatpush1.msra.mxu0 0.0
      %752 = vmatprep.subr.mxu0 0.0
      %753 = vmatpush1.msra.mxu0 0.0
      %754 = vmatprep.subr.mxu0 0.0
      %755 = vmatpush1.msra.mxu0 0.0
      %756 = vmatprep.subr.mxu0 0.0
      %757 = vmatpush1.msra.mxu0 0.0
      %758 = vmatprep.subr.mxu0 0.0
      %759 = vmatpush1.msra.mxu0 0.0
      %760 = vmatprep.subr.mxu0 0.0
      %761 = vmatpush1.msra.mxu0 0.0
      %762 = vmatprep.subr.mxu0 0.0
      %763 = vmatpush1.msra.mxu0 0.0
      %764 = vmatprep.subr.mxu0 0.0
      %765 = vmatpush1.msra.mxu0 0.0
      %766 = vmatprep.subr.mxu0 0.0
      %767 = vmatpush1.msra.mxu0 0.0
      %768 = vmatprep.mubr.f32.mxu0 0.0
      %769 = vmatmul.mubr.f32.gmra.mrb[0].mxu0 %v243
      %v770 = vpop.f32.mrb[0].mxu0
      %v771 = vadd.f32 %v223, %v770
      %v772 = vpop.f32.mrb[0].mxu0
      %v773 = vadd.f32 %v223, %v772
      %774 = vdwg.mxu0
      %775 = vmatprep.subr.mxu0 %v276
      %776 = vmatpush1.msra.mxu0 %v274
      %777 = vmatprep.subr.mxu0 0.0
      %778 = vmatpush1.msra.mxu0 0.0
      %779 = vmatprep.subr.mxu0 0.0
      %780 = vmatpush1.msra.mxu0 0.0
      %781 = vmatprep.subr.mxu0 0.0
      %782 = vmatpush1.msra.mxu0 0.0
      %783 = vmatprep.subr.mxu0 0.0
      %784 = vmatpush1.msra.mxu0 0.0
      %785 = vmatprep.subr.mxu0 0.0
      %786 = vmatpush1.msra.mxu0 0.0
      %787 = vmatprep.subr.mxu0 0.0
      %788 = vmatpush1.msra.mxu0 0.0
      %789 = vmatprep.subr.mxu0 0.0
      %790 = vmatpush1.msra.mxu0 0.0
      %791 = vmatprep.subr.mxu0 0.0
      %792 = vmatpush1.msra.mxu0 0.0
      %793 = vmatprep.subr.mxu0 0.0
      %794 = vmatpush1.msra.mxu0 0.0
      %795 = vmatprep.subr.mxu0 0.0
      %796 = vmatpush1.msra.mxu0 0.0
      %797 = vmatprep.subr.mxu0 0.0
      %798 = vmatpush1.msra.mxu0 0.0
      %799 = vmatprep.subr.mxu0 0.0
      %800 = vmatpush1.msra.mxu0 0.0
      %801 = vmatprep.subr.mxu0 0.0
      %802 = vmatpush1.msra.mxu0 0.0
      %803 = vmatprep.subr.mxu0 0.0
      %804 = vmatpush1.msra.mxu0 0.0
      %805 = vmatprep.subr.mxu0 0.0
      %806 = vmatpush1.msra.mxu0 0.0
      %807 = vmatprep.subr.mxu0 0.0
      %808 = vmatpush1.msra.mxu0 0.0
      %809 = vmatprep.subr.mxu0 0.0
      %810 = vmatpush1.msra.mxu0 0.0
      %811 = vmatprep.subr.mxu0 0.0
      %812 = vmatpush1.msra.mxu0 0.0
      %813 = vmatprep.subr.mxu0 0.0
      %814 = vmatpush1.msra.mxu0 0.0
      %815 = vmatprep.subr.mxu0 0.0
      %816 = vmatpush1.msra.mxu0 0.0
      %817 = vmatprep.subr.mxu0 0.0
      %818 = vmatpush1.msra.mxu0 0.0
      %819 = vmatprep.subr.mxu0 0.0
      %820 = vmatpush1.msra.mxu0 0.0
      %821 = vmatprep.subr.mxu0 0.0
      %822 = vmatpush1.msra.mxu0 0.0
      %823 = vmatprep.subr.mxu0 0.0
      %824 = vmatpush1.msra.mxu0 0.0
      %825 = vmatprep.subr.mxu0 0.0
      %826 = vmatpush1.msra.mxu0 0.0
      %827 = vmatprep.subr.mxu0 0.0
      %828 = vmatpush1.msra.mxu0 0.0
      %829 = vmatprep.subr.mxu0 0.0
      %830 = vmatpush1.msra.mxu0 0.0
      %831 = vmatprep.subr.mxu0 0.0
      %832 = vmatpush1.msra.mxu0 0.0
      %833 = vmatprep.subr.mxu0 0.0
      %834 = vmatpush1.msra.mxu0 0.0
      %835 = vmatprep.subr.mxu0 0.0
      %836 = vmatpush1.msra.mxu0 0.0
      %837 = vmatprep.subr.mxu0 0.0
      %838 = vmatpush1.msra.mxu0 0.0
      %839 = vmatprep.mubr.f32.mxu0 0.0
      %840 = vmatmul.mubr.f32.gmra.mrb[0].mxu0 %v243
      %v841 = vpop.f32.mrb[0].mxu0
      %v842 = vadd.f32 %v223, %v841
      %v843 = vpop.f32.mrb[0].mxu0
      %v844 = vadd.f32 %v223, %v843
      %845 = vdwg.mxu0
      %v862 = vcombine.low %v345, %v347
      %v863 = vcombine.low %v416, %v418
      %v865 = vunpack.c.l.s4 1983009808
      %v866 = vunpack.c.0.s8 %v865
      %v867 = vlaneseq
      %v868 = vshrl.u32 %v867, 7
      %v869 = vsub.s32 %v866, %v868
      %v870 = vrot.slane %v862, %v869
      %v872 = vunpack.c.l.s4 1983009808
      %v873 = vunpack.c.0.s8 %v872
      %v874 = vlaneseq
      %v875 = vshrl.u32 %v874, 7
      %v876 = vsub.s32 %v873, %v875
      %v877 = vrot.slane %v863, %v876
      %v878 = vcombine.low %v870, %v877
      %v879 = vcombine.low %v487, %v489
      %v880 = vcombine.low %v558, %v560
      %v882 = vunpack.c.l.s4 1983009808
      %v883 = vunpack.c.0.s8 %v882
      %v884 = vlaneseq
      %v885 = vshrl.u32 %v884, 7
      %v886 = vsub.s32 %v883, %v885
      %v887 = vrot.slane %v879, %v886
      %v889 = vunpack.c.l.s4 1983009808
      %v890 = vunpack.c.0.s8 %v889
      %v891 = vlaneseq
      %v892 = vshrl.u32 %v891, 7
      %v893 = vsub.s32 %v890, %v892
      %v894 = vrot.slane %v880, %v893
      %v895 = vcombine.low %v887, %v894
      %v896 = vcombine.low %v629, %v631
      %v897 = vcombine.low %v700, %v702
      %v899 = vunpack.c.l.s4 1983009808
      %v900 = vunpack.c.0.s8 %v899
      %v901 = vlaneseq
      %v902 = vshrl.u32 %v901, 7
      %v903 = vsub.s32 %v900, %v902
      %v904 = vrot.slane %v896, %v903
      %v906 = vunpack.c.l.s4 1983009808
      %v907 = vunpack.c.0.s8 %v906
      %v908 = vlaneseq
      %v909 = vshrl.u32 %v908, 7
      %v910 = vsub.s32 %v907, %v909
      %v911 = vrot.slane %v897, %v910
      %v912 = vcombine.low %v904, %v911
      %v913 = vcombine.low %v771, %v773
      %v914 = vcombine.low %v842, %v844
      %v916 = vunpack.c.l.s4 1983009808
      %v917 = vunpack.c.0.s8 %v916
      %v918 = vlaneseq
      %v919 = vshrl.u32 %v918, 7
      %v920 = vsub.s32 %v917, %v919
      %v921 = vrot.slane %v913, %v920
      %v923 = vunpack.c.l.s4 1983009808
      %v924 = vunpack.c.0.s8 %v923
      %v925 = vlaneseq
      %v926 = vshrl.u32 %v925, 7
      %v927 = vsub.s32 %v924, %v926
      %v928 = vrot.slane %v914, %v927
      %v929 = vcombine.low %v921, %v928
      %934 = vst [vmem:[%s208] sm:$0xff] %v878
      %935 = vst [vmem:[%s208 + $0x8] sm:$0xff] %v895
      %936 = vst [vmem:[%s208 + $0x10] sm:$0xff] %v912
      %937 = vst [vmem:[%s208 + $0x18] sm:$0xff] %v929
      %s938 = smul.u32 16, %s19
      %p939 = scmp.lt.s32.totalorder %s18, 1
      %s940 = scalar_select %p939, %s18, 1
      %p941 = scmp.lt.s32.totalorder %s938, 31
      %s942 = scalar_select %p941, %s938, 31
      %s943 = smul.addr %s940, 32
      %s944 = sadd.s32 %s942, %s943
      %s945 = smul.addr %s944, 2
      %s946 = scalar_lea.vmem %s3, %s945
      // Predicated region
      $region33: #{outconv.1} parent=31 // pred_check
        %p947 = pneg %p116
      $region34: #{outconv.1} parent=31 // pred_check_branch
        %949 = sbr.rel (%p947) target = $region36
      $region35: #{outconv.1} parent=31 // pred_region
        %s950 = smul.u32 16, %s19
      $region36: #{outconv.1} parent=31 // pred_fallthru
        _
    $region32: #{outconv.1} parent=5 // pred_fallthru
      _
    %p951 = scmp.le.s32.totalorder 2, %s9
    // Predicated region
    $region37: #{outconv.1} parent=5 // pred_check
      %p952 = pneg %p951
    $region38: #{outconv.1} parent=5 // pred_check_branch
      %954 = sbr.rel (%p952) target = $region40
    $region39: #{outconv.1} parent=5 // pred_region
      %s955 = ssub.s32 %s9, 2
      // Predicated region
      $region41: #{outconv.1} parent=39 // pred_check
        %p956 = pneg %p122
      $region42: #{outconv.1} parent=39 // pred_check_branch
        %958 = sbr.rel (%p956) target = $region44
      $region43: #{outconv.1} parent=39 // pred_region
        %s959 = smul.u32 16, %s21
        %p960 = scmp.lt.s32.totalorder %s20, 1
        %s961 = scalar_select %p960, %s20, 1
        %p962 = scmp.lt.s32.totalorder %s959, 31
        %s963 = scalar_select %p962, %s959, 31
        %s964 = smul.addr %s961, 32
        %s965 = sadd.s32 %s963, %s964
        %s966 = smul.addr %s965, 2
        %s967 = scalar_lea.vmem %s3, %s966
      $region44: #{outconv.1} parent=39 // pred_fallthru
        _
    $region40: #{outconv.1} parent=5 // pred_fallthru
      _
  $region6: #{outconv.1} parent=0 // loop_footer
    %s13 = sadd.s32 1, %s9
  $region7: #{outconv.1} parent=0 // loop_footer_branch
    %8 = sbr.rel target = $region3
  $region8: #{outconv.1} parent=0 // loop_exit
    _

</llo_original>
